<compile_context>
chip_gen: v5e
topology: v5e:2x2
jax: 0.10.0
libtpu: 0.0.40
codegen_flags: <defaults>
</compile_context>

<pallas_src>
import functools

import jax
import jax.numpy as jnp
from jax.experimental import pallas as pl
from jax.experimental.pallas import tpu as pltpu

_LANE = 128


def _vmem_limit_and_tile():
    """Generation-aware scoped-VMEM limit and per-buffer tile-byte target."""
    try:
        cap = int(pltpu.get_tpu_info().vmem_capacity_bytes)
    except Exception:
        cap = 64 * 1024 * 1024                        # conservative (v7x-sized) fallback
    vmem_limit = min(cap * 3 // 4, 96 * 1024 * 1024)  # v5e/v6e: 96 MiB, v7x: 48 MiB
    tile_bytes = vmem_limit // 6                      # ~16 MiB (v5e/v6e) / ~8 MiB (v7x)
    return vmem_limit, tile_bytes


def _params(vmem_limit, *sem):
    return pltpu.CompilerParams(dimension_semantics=sem,
                                vmem_limit_bytes=int(vmem_limit))


def _sumsq(xf):
    # (bb, rt, 128) f32 -> (bb, 1, 1). Sublane axis first (plain vreg adds),
    # then a single cross-lane reduce per row (XLU).
    sq = xf * xf
    s = jnp.sum(sq, axis=-2, keepdims=True)           # (bb, 1, 128)
    return jnp.sum(s, axis=-1, keepdims=True)         # (bb, 1, 1)


# --------------------------------------------------------------------------- kernels
def _onepass3d_kernel(w_ref, x_ref, o_ref, *, eps, inv_f):
    # x_ref / o_ref: (bb, r, 128) -- full feature axis resident per batch block.
    x = x_ref[...]
    ss = _sumsq(x.astype(jnp.float32))
    scale = (jax.lax.rsqrt(ss * inv_f + eps) * w_ref[0]).astype(x.dtype)
    o_ref[...] = (x * scale).astype(o_ref.dtype)


def _onepass2d_kernel(w_ref, x_ref, o_ref, *, eps, inv_f):
    # x_ref / o_ref: (bb, F) with F == full (possibly non-128-multiple) feature dim.
    x = x_ref[...]
    xf = x.astype(jnp.float32)
    ss = jnp.sum(xf * xf, axis=-1, keepdims=True)
    scale = (jax.lax.rsqrt(ss * inv_f + eps) * w_ref[0]).astype(x.dtype)
    o_ref[...] = (x * scale).astype(o_ref.dtype)


def _rowscale_kernel(w_ref, x_ref, scale_ref, *, eps, inv_f, rt, r, mask_tail):
    # Two-pass path, pass 1: accumulate per-row sum-of-squares directly into the
    # resident (bb, 1, 1) f32 output block; finalize scale on the last j step.
    j = pl.program_id(1)
    xf = x_ref[...].astype(jnp.float32)
    if mask_tail:  # ragged R tail: zero rows beyond r before squaring
        row = jax.lax.broadcasted_iota(jnp.int32, xf.shape, 1) + j * rt
        xf = jnp.where(row < r, xf, 0.0)
    ss = _sumsq(xf)

    @pl.when(j == 0)
    def _():
        scale_ref[...] = jnp.zeros_like(scale_ref)

    scale_ref[...] += ss

    @pl.when(j == pl.num_programs(1) - 1)
    def _():
        scale_ref[...] = jax.lax.rsqrt(scale_ref[...] * inv_f + eps) * w_ref[0]


def _apply_scale_kernel(scale_ref, x_ref, o_ref):
    # Two-pass path, pass 2: o = x * per-row scale.
    x = x_ref[...]
    o_ref[...] = (x * scale_ref[...].astype(x.dtype)).astype(o_ref.dtype)


# --------------------------------------------------------------------------- runners
def _run_3d(x3, w, *, eps, true_f, tile_bytes, vmem_budget, vmem_limit):
    """RMS-norm over the trailing (r, 128) dims of a (b, r, 128) array."""
    b, r, lane = x3.shape
    dtype = x3.dtype
    itemsize = jnp.dtype(dtype).itemsize
    row_bytes = r * lane * itemsize
    inv_f = 1.0 / float(true_f)
    # 2x in + 2x out (double-buffered) + ~2 tile-sized f32 temporaries.
    per_row = r * lane * (4 * itemsize + 8)

    if row_bytes <= tile_bytes and per_row <= vmem_budget:
        # ---------- single pass: full reduction axis resident per batch block ----------
        bb = max(1, min(b, tile_bytes // row_bytes, vmem_budget // per_row))
        if b >= 8:
            bb = min(bb, max(1, b // 8))      # >= 8 grid steps (>= 4 per v7x core)
        elif b >= 2:
            bb = min(bb, pl.cdiv(b, 2))       # both cores get work
        nb = pl.cdiv(b, bb)                   # partial last batch block is fine (per-row)
        return pl.pallas_call(
            functools.partial(_onepass3d_kernel, eps=eps, inv_f=inv_f),
            out_shape=jax.ShapeDtypeStruct((b, r, lane), dtype),
            grid=(nb,),
            in_specs=[
                pl.BlockSpec(memory_space=pltpu.SMEM),                 # scalar weight
                pl.BlockSpec((bb, r, lane), lambda i: (i, 0, 0)),
            ],
            out_specs=pl.BlockSpec((bb, r, lane), lambda i: (i, 0, 0)),
            compiler_params=_params(vmem_limit, "parallel"),
        )(w, x3)

    # ---------- two-pass F-tiled path (row too large for a single VMEM block) ----------
    bb = min(8, b)
    if b >= 2:
        bb = min(bb, pl.cdiv(b, 2))           # nb >= 2 so both v7x cores run pass 1
    # TODO(synk): for b == 1 pass 1 still runs on one TensorCore; splitting the R
    # reduction over a leading parallel axis would fix it but is not needed here.
    nb = pl.cdiv(b, bb)
    in_rtrow = bb * lane * itemsize           # bytes of one rt-row of the input tile

    def _pick_rt(tile_cap_bytes, footprint_per_rtrow):
        rt = min(tile_cap_bytes // in_rtrow, vmem_budget // footprint_per_rtrow)
        if rt >= r:
            return r
        return max(8, (rt // 8) * 8)

    # Pass 1 has no tile-sized output block -> allow ~2x larger input tiles.
    rt1 = _pick_rt(2 * tile_bytes, bb * lane * (2 * itemsize + 2 * 4))
    rt2 = _pick_rt(tile_bytes, bb * lane * (5 * itemsize))
    nr1 = pl.cdiv(r, rt1)
    nr2 = pl.cdiv(r, rt2)

    # Pass 1: scale = rsqrt(mean(x^2) + eps) * w, accumulated over R tiles.
    scale = pl.pallas_call(
        functools.partial(_rowscale_kernel, eps=eps, inv_f=inv_f, rt=rt1, r=r,
                          mask_tail=(r % rt1 != 0)),
        out_shape=jax.ShapeDtypeStruct((b, 1, 1), jnp.float32),
        grid=(nb, nr1),
        in_specs=[
            pl.BlockSpec(memory_space=pltpu.SMEM),                     # scalar weight
            pl.BlockSpec((bb, rt1, lane), lambda i, j: (i, j, 0)),
        ],
        out_specs=pl.BlockSpec((bb, 1, 1), lambda i, j: (i, 0, 0)),
        compiler_params=_params(vmem_limit, "parallel", "arbitrary"),
    )(w, x3)

    # Pass 2: o = x * scale.
    return pl.pallas_call(
        _apply_scale_kernel,
        out_shape=jax.ShapeDtypeStruct((b, r, lane), dtype),
        grid=(nb, nr2),
        in_specs=[
            pl.BlockSpec((bb, 1, 1), lambda i, j: (i, 0, 0)),
            pl.BlockSpec((bb, rt2, lane), lambda i, j: (i, j, 0)),
        ],
        out_specs=pl.BlockSpec((bb, rt2, lane), lambda i, j: (i, j, 0)),
        compiler_params=_params(vmem_limit, "parallel", "parallel"),
    )(scale, x3)


def adj_rmsnorm(x, weight, *, eps=1e-8, tile_bytes=None):
    """RMS norm over all non-batch dims of x, scaled by a scalar weight."""
    orig_shape = x.shape
    dtype = x.dtype
    b = orig_shape[0]
    x_flat = x.reshape(b, -1)                 # same as x.view(b, -1); no copy
    f_true = x_flat.shape[1]
    itemsize = jnp.dtype(dtype).itemsize
    w = jnp.asarray(weight, jnp.float32).reshape((1,))

    vmem_limit, default_tile = _vmem_limit_and_tile()
    if tile_bytes is None:
        tile_bytes = default_tile
    vmem_budget = int(vmem_limit * 0.85)
    inv_f = 1.0 / float(f_true)

    if f_true % _LANE == 0:
        # Free reshape to (b, r, 128): lane-dense tiles, no pad, no slice.
        x3 = x_flat.reshape(b, f_true // _LANE, _LANE)
        out3 = _run_3d(x3, w, eps=eps, true_f=f_true, tile_bytes=tile_bytes,
                       vmem_budget=vmem_budget, vmem_limit=vmem_limit)
        return out3.reshape(orig_shape)

    # F not a multiple of 128: keep the 2-D (b, F) layout (trailing block dim equals
    # the full array dim) so no host-side pad / slice round trips are needed.
    row_bytes = f_true * itemsize
    per_row = f_true * (4 * itemsize + 8)
    if row_bytes <= tile_bytes and per_row <= vmem_budget:
        bb = max(1, min(b, tile_bytes // row_bytes, vmem_budget // per_row))
        ok = True
        if bb >= b:
            bb = b                                        # block covers the whole batch
        elif bb >= 8:
            bb = (bb // 8) * 8                            # sublane-aligned batch blocks
            if b >= 64:
                bb = min(bb, max(8, (b // 8) // 8 * 8))   # keep >= 8 grid steps
        else:
            ok = False                                    # 1..7 rows and bb < b: needs pad
        if ok:
            nb = pl.cdiv(b, bb)
            out = pl.pallas_call(
                functools.partial(_onepass2d_kernel, eps=eps, inv_f=inv_f),
                out_shape=jax.ShapeDtypeStruct((b, f_true), dtype),
                grid=(nb,),
                in_specs=[
                    pl.BlockSpec(memory_space=pltpu.SMEM),             # scalar weight
                    pl.BlockSpec((bb, f_true), lambda i: (i, 0)),
                ],
                out_specs=pl.BlockSpec((bb, f_true), lambda i: (i, 0)),
                compiler_params=_params(vmem_limit, "parallel"),
            )(w, x_flat)
            return out.reshape(orig_shape)

    # Rare corner (odd F AND rows too large / unalignable batch blocks): pad F once
    # on the host, run the 3-D path (zeros are inert since the mean uses true F),
    # then slice the padding back off.
    f_pad = pl.cdiv(f_true, _LANE) * _LANE
    x2 = jnp.pad(x_flat, ((0, 0), (0, f_pad - f_true)))
    out3 = _run_3d(x2.reshape(b, f_pad // _LANE, _LANE), w, eps=eps, true_f=f_true,
                   tile_bytes=tile_bytes, vmem_budget=vmem_budget, vmem_limit=vmem_limit)
    return out3.reshape(b, f_pad)[:, :f_true].reshape(orig_shape)


def adj_rmsnorm_ref(x, weight, *, eps=1e-8):
    """Pure-JAX reference matching the PyTorch forward."""
    b = x.shape[0]
    xf = x.reshape(b, -1).astype(jnp.float32)
    rms = jnp.sqrt(jnp.mean(xf * xf, axis=1, keepdims=True) + eps)
    out = (xf / rms) * jnp.asarray(weight, jnp.float32).reshape(())
    return out.reshape(x.shape).astype(x.dtype)


if __name__ == "__main__":
    key = jax.random.PRNGKey(0)
    weight = jnp.ones((1,), dtype=jnp.float32)   # scalar_weight=True -> weight = 1.0

    def _check(x, tol, **kw):
        out = jax.block_until_ready(adj_rmsnorm(x, weight, eps=1e-8, **kw))
        ref = adj_rmsnorm_ref(x, weight, eps=1e-8)
        assert out.shape == x.shape and out.dtype == x.dtype
        assert jnp.allclose(out.astype(jnp.float32), ref.astype(jnp.float32),
                            atol=tol, rtol=tol), f"mismatch for {x.shape} {x.dtype}"

    # 1) Main NCHW case: F = 1024 (single-pass 3-D path, no pad/slice).
    _check(jax.random.normal(jax.random.fold_in(key, 0), (2, 4, 16, 16), jnp.float32), 1e-5)
    # 2) F not a multiple of 128 (2-D full-feature path, no host pad/slice).
    _check(jax.random.normal(jax.random.fold_in(key, 1), (3, 5, 7, 9), jnp.float32), 1e-5)
    # 3) Force the two-pass F-tiled fallback with a tiny tile budget.
    _check(jax.random.normal(jax.random.fold_in(key, 2), (2, 4, 32, 16), jnp.float32), 1e-5,
           tile_bytes=2048)
    # 4) Two-pass path with a ragged R tail (exercises the in-kernel iota mask).
    _check(jax.random.normal(jax.random.fold_in(key, 3), (2, 11, 16, 8), jnp.float32), 1e-5,
           tile_bytes=2048)
    # 5) Partial last batch block (b % bb != 0) on the single-pass path.
    _check(jax.random.normal(jax.random.fold_in(key, 4), (17, 4, 8, 16), jnp.float32), 1e-5)
    # 6) bf16 input (kept in bf16 for HBM traffic; f32 square-accumulate inside).
    _check(jax.random.normal(jax.random.fold_in(key, 5), (4, 8, 16, 16), jnp.float32)
           .astype(jnp.bfloat16), 8e-2)

    print("KERNEL_OK")
</pallas_src>

<mosaic_0001>
module attributes {stable_mosaic.version = 11 : i64} {
  func.func @_onepass3d_kernel(%arg0: i32, %arg1: memref<1xf32, #tpu.memory_space<smem>>, %arg2: memref<1x8x128xf32, #tpu.memory_space<vmem>>, %arg3: memref<1x8x128xf32, #tpu.memory_space<vmem>>) attributes {dimension_semantics = [#tpu.dimension_semantics<parallel>], iteration_bounds = array<i64: 2>, scalar_prefetch = 0 : i64, scratch_operands = 0 : i64, tpu.core_type = #tpu.core_type<tc>, window_params = [{transform_indices = @transform_0, window_bounds = array<i64: 1>}, {transform_indices = @transform_1, window_bounds = array<i64: 1, 8, 128>}, {transform_indices = @transform_2, window_bounds = array<i64: 1, 8, 128>}]} {
    %c0 = arith.constant 0 : index
    %c0_0 = arith.constant 0 : index
    %c0_1 = arith.constant 0 : index
    %0 = vector.load %arg2[%c0, %c0_0, %c0_1] : memref<1x8x128xf32, #tpu.memory_space<vmem>>, vector<1x8x128xf32>
    %1 = arith.mulf %0, %0 : vector<1x8x128xf32>
    %cst = arith.constant dense<0.000000e+00> : vector<1x128xf32>
    %2 = vector.multi_reduction <add>, %1, %cst [1] : vector<1x8x128xf32> to vector<1x128xf32>
    %3 = vector.shape_cast %2 : vector<1x128xf32> to vector<1x1x128xf32>
    %cst_2 = arith.constant dense<0.000000e+00> : vector<1x1xf32>
    %4 = vector.multi_reduction <add>, %3, %cst_2 [2] : vector<1x1x128xf32> to vector<1x1xf32>
    %5 = vector.shape_cast %4 : vector<1x1xf32> to vector<1x1x1xf32>
    %cst_3 = arith.constant 9.765625E-4 : f32
    %6 = vector.broadcast %cst_3 : f32 to vector<1x1x1xf32>
    %7 = arith.mulf %5, %6 : vector<1x1x1xf32>
    %cst_4 = arith.constant 9.99999993E-9 : f32
    %8 = vector.broadcast %cst_4 : f32 to vector<1x1x1xf32>
    %9 = arith.addf %7, %8 : vector<1x1x1xf32>
    %10 = math.rsqrt %9 : vector<1x1x1xf32>
    %c0_5 = arith.constant 0 : index
    %11 = memref.load %arg1[%c0_5] : memref<1xf32, #tpu.memory_space<smem>>
    %12 = vector.broadcast %11 : f32 to vector<1x1x1xf32>
    %13 = arith.mulf %10, %12 : vector<1x1x1xf32>
    %14 = vector.broadcast %13 : vector<1x1x1xf32> to vector<1x8x128xf32>
    %15 = arith.mulf %0, %14 : vector<1x8x128xf32>
    %c0_6 = arith.constant 0 : index
    %c0_7 = arith.constant 0 : index
    %c0_8 = arith.constant 0 : index
    %16 = vector.load %arg3[%c0_6, %c0_7, %c0_8] : memref<1x8x128xf32, #tpu.memory_space<vmem>>, vector<1x8x128xf32>
    tpu.vector_store %arg3[%c0_6, %c0_7, %c0_8], %15 {strides = array<i32>} : memref<1x8x128xf32, #tpu.memory_space<vmem>>, vector<1x8x128xf32>,
    return
  }
  func.func @transform_0(%arg0: i32) -> i32 {
    %c0_i32 = arith.constant 0 : i32
    %c0_i32_0 = arith.constant 0 : i32
    return %c0_i32 : i32
  }
  func.func @transform_1(%arg0: i32) -> (i32, i32, i32) {
    %c0_i32 = arith.constant 0 : i32
    %c0_i32_0 = arith.constant 0 : i32
    %c0_i32_1 = arith.constant 0 : i32
    return %arg0, %c0_i32, %c0_i32_0 : i32, i32, i32
  }
  func.func @transform_2(%arg0: i32) -> (i32, i32, i32) {
    %c0_i32 = arith.constant 0 : i32
    %c0_i32_0 = arith.constant 0 : i32
    %c0_i32_1 = arith.constant 0 : i32
    return %arg0, %c0_i32, %c0_i32_0 : i32, i32, i32
  }
}

</mosaic_0001>

<llo_original>
// kernel: tpu_custom_call.1
$region0: #{tpu_custom_call.1}
  #allocation0 [shape = 'u32[]', space=smem, size = 0x4, offset = 0x4, fixed_abs, tag = 'smem constant byte address 0x4 - core index']
  #allocation1 [shape = 'u32[72,128]{1,0:T(1,128)}', space=vmem, size = 0x9000, scoped, tag = 'internal scratch']
  #allocation2 [shape = 'f32[1]{0:T(128)S(6)}', space=smem, size = 0x200, scoped, tag = 'scoped memory for tpu_custom_call.1']
  %s0 = inlined_call_operand.<no memory space> [shape: f32[1], index: 0, kind: input, shape index: {}]
  %s1 = inlined_call_operand.hbm [shape: f32[2,8,128], index: 1, kind: input, shape index: {}]
  %s2 = inlined_call_operand.hbm [shape: f32[2,8,128], index: 2, kind: output, shape index: {}]
  %s3 = sld [smem:[#allocation0]]
  $region45: #{tpu_custom_call.1} parent=0
    _
  %s5 = ssub.s32 1, %s3
  %s6 = scalar_select 0, %s5, %s3
  %7 = sst [smem:[#allocation2]] %s0
  $region1: #{tpu_custom_call.1} parent=0
    #allocation3 [shape = 'u8[8192]{0}', space=vmem, size = 0x2000, scoped, tag = 'input window, operand 1']
    #allocation4 [shape = 's32[2]{0}', space=sflag, size = 0x8, scoped, tag = 'scoped memory for tpu_custom_call.1']
    #allocation5 [shape = 's32[2]{0}', space=sflag, size = 0x8, scoped, tag = 'scoped memory for tpu_custom_call.1']
    #allocation6 [shape = 'u8[8192]{0}', space=vmem, size = 0x2000, scoped, tag = 'output window, operand 0']
    %8 = vsyncpa [#allocation4], 0
    %s9 = scalar_lea.sflag [#allocation4], 1
    %10 = vsyncpa %s9, 0
    %11 = vsyncpa [#allocation5], 0
    %s12 = scalar_lea.sflag [#allocation5], 1
    %13 = vsyncpa %s12, 0
    loop: start=0, step=1, limit=4
    $region2: #{tpu_custom_call.1} parent=1 // loop_pre_header
      _
    $region3: #{tpu_custom_call.1} parent=1 // loop_header
      %s15 = sphi 0, %s19
      %p16 = scmp.ge.s32.totalorder %s15, 4
      %s23 = sphi 0, %s23
      %s25 = sphi 0, %s23
      %s26 = sphi 0, %s25
      %s40 = sphi 0, %s26
      %s46 = sphi 0, %s48
      %s49 = sphi 0, %s46
      %s50 = sphi 0, %s49
      %s66 = sphi 0, %s50
      %s72 = sphi 0, %s74
      %s75 = sphi 0, %s72
      %s76 = sphi 0, %s75
      %s92 = sphi 0, %s76
    $region4: #{tpu_custom_call.1} parent=1 // loop_header_branch
      %18 = sbr.rel (%p16) target = $region8
    $region5: #{tpu_custom_call.1} parent=1 // loop_body
      %s20 = ssub.s32 %s15, 1
      %s21 = ssub.s32 %s15, 2
      %s22 = sadd.s32 %s15, 1
      %s24 = sadd.s32 %s23, 1
      %p27 = scmp.eq.s32.totalorder %s15, 1
      %p28 = scmp.ne.s32.totalorder %s23, %s25
      %p29 = scmp.eq.s32.totalorder %s15, 0
      %p30 = por %p28, %p29
      %p31 = scmp.ne.s32.totalorder %s23, %s25
      %p32 = scmp.eq.s32.totalorder %s20, 1
      %p33 = por %p31, %p32
      %p34 = scmp.ne.s32.totalorder %s25, %s26
      %p35 = scmp.eq.s32.totalorder %s20, 0
      %p36 = por %p34, %p35
      %p37 = scmp.ne.s32.totalorder %s25, %s26
      %p38 = scmp.eq.s32.totalorder %s21, 1
      %p39 = por %p37, %p38
      %p41 = scmp.ne.s32.totalorder %s26, %s40
      %p42 = scmp.eq.s32.totalorder %s21, 0
      %p43 = por %p41, %p42
      %s44 = ssub.s32 %s15, %s22
      %p45 = scmp.eq.s32.totalorder %s44, 0
      %s47 = sadd.s32 %s46, 1
      %s48 = scalar_select %p45, %s46, %s47
      %p51 = pneg %p45
      %p52 = scmp.eq.s32.totalorder %s15, 1
      %p53 = por %p51, %p52
      %p54 = scmp.ne.s32.totalorder %s46, %s49
      %p55 = scmp.eq.s32.totalorder %s15, 0
      %p56 = por %p54, %p55
      %p57 = scmp.ne.s32.totalorder %s46, %s49
      %p58 = scmp.eq.s32.totalorder %s20, 1
      %p59 = por %p57, %p58
      %p60 = scmp.ne.s32.totalorder %s49, %s50
      %p61 = scmp.eq.s32.totalorder %s20, 0
      %p62 = por %p60, %p61
      %p63 = scmp.ne.s32.totalorder %s49, %s50
      %p64 = scmp.eq.s32.totalorder %s21, 1
      %p65 = por %p63, %p64
      %p67 = scmp.ne.s32.totalorder %s50, %s66
      %p68 = scmp.eq.s32.totalorder %s21, 0
      %p69 = por %p67, %p68
      %s70 = ssub.s32 %s15, %s22
      %p71 = scmp.eq.s32.totalorder %s70, 0
      %s73 = sadd.s32 %s72, 1
      %s74 = scalar_select %p71, %s72, %s73
      %p77 = pneg %p71
      %p78 = scmp.eq.s32.totalorder %s15, 1
      %p79 = por %p77, %p78
      %p80 = scmp.ne.s32.totalorder %s72, %s75
      %p81 = scmp.eq.s32.totalorder %s15, 0
      %p82 = por %p80, %p81
      %p83 = scmp.ne.s32.totalorder %s72, %s75
      %p84 = scmp.eq.s32.totalorder %s20, 1
      %p85 = por %p83, %p84
      %p86 = scmp.ne.s32.totalorder %s75, %s76
      %p87 = scmp.eq.s32.totalorder %s20, 0
      %p88 = por %p86, %p87
      %p89 = scmp.ne.s32.totalorder %s75, %s76
      %p90 = scmp.eq.s32.totalorder %s21, 1
      %p91 = por %p89, %p90
      %p93 = scmp.ne.s32.totalorder %s76, %s92
      %p94 = scmp.eq.s32.totalorder %s21, 0
      %p95 = por %p93, %p94
      %p96 = scmp.le.s32.totalorder 1, %s15
      %p97 = scmp.lt.s32.totalorder %s15, 3
      %p98 = pnand %p96, %p97
      %p99 = pneg %p98
      // Predicated region
      $region9: #{tpu_custom_call.1} parent=5 // pred_check
        _
      $region10: #{tpu_custom_call.1} parent=5 // pred_check_branch
        %101 = sbr.rel (%p98) target = $region12
      $region11: #{tpu_custom_call.1} parent=5 // pred_region
        %s102 = ssub.s32 %s15, 1
        // Predicated region
        $region13: #{tpu_custom_call.1} parent=11 // pred_check
          %p103 = pneg %p36
        $region14: #{tpu_custom_call.1} parent=11 // pred_check_branch
          %105 = sbr.rel (%p103) target = $region16
        $region15: #{tpu_custom_call.1} parent=11 // pred_region
          _
        $region16: #{tpu_custom_call.1} parent=11 // pred_fallthru
          _
      $region12: #{tpu_custom_call.1} parent=5 // pred_fallthru
        _
      %p106 = scmp.lt.s32.totalorder %s15, 2
      // Predicated region
      $region17: #{tpu_custom_call.1} parent=5 // pred_check
        %p107 = pneg %p106
      $region18: #{tpu_custom_call.1} parent=5 // pred_check_branch
        %109 = sbr.rel (%p107) target = $region20
      $region19: #{tpu_custom_call.1} parent=5 // pred_region
        // Predicated region
        $region21: #{tpu_custom_call.1} parent=19 // pred_check
          %p110 = pneg %p56
        $region22: #{tpu_custom_call.1} parent=19 // pred_check_branch
          %112 = sbr.rel (%p110) target = $region24
        $region23: #{tpu_custom_call.1} parent=19 // pred_region
          %s113 = sand.u32 %s46, 1
          %s114 = scalar_lea.sflag [#allocation4], %s113
          %s115 = sand.u32 %s46, 1
          %s116 = smul.addr %s115, 8
          %s117 = scalar_lea.vmem [#allocation3], %s116
          %119 = vsyncadd %s114, 0
          %s120 = smul.addr %s15, 8
          %s121 = scalar_lea.hbm %s1, %s120
          %s123 = sshll.u32 %s121, 4
          %s124 = int_to_ptr.hbm [resolvable:$true] %s123
          %s125 = sshll.u32 %s117, 4
          %s126 = int_to_ptr.vmem [resolvable:$true] %s125
          %128 = dma.hbm_to_vmem [thread:$0]  %s124, 128, %s126, %s114
        $region24: #{tpu_custom_call.1} parent=19 // pred_fallthru
          _
      $region20: #{tpu_custom_call.1} parent=5 // pred_fallthru
        _
      %p129 = scmp.le.s32.totalorder 1, %s15
      %p130 = scmp.lt.s32.totalorder %s15, 3
      %p131 = pnand %p129, %p130
      %p132 = pneg %p131
      // Predicated region
      $region25: #{tpu_custom_call.1} parent=5 // pred_check
        _
      $region26: #{tpu_custom_call.1} parent=5 // pred_check_branch
        %134 = sbr.rel (%p131) target = $region28
      $region27: #{tpu_custom_call.1} parent=5 // pred_region
        %s135 = ssub.s32 %s15, 1
        %s136 = sand.u32 %s49, 1
        %s137 = scalar_lea.sflag [#allocation4], %s136
        %s138 = sand.u32 %s49, 1
        %s139 = smul.addr %s138, 8
        %s140 = scalar_lea.vmem [#allocation3], %s139
        // Predicated region
        $region29: #{tpu_custom_call.1} parent=27 // pred_check
          %p141 = pneg %p62
        $region30: #{tpu_custom_call.1} parent=27 // pred_check_branch
          %143 = sbr.rel (%p141) target = $region32
        $region31: #{tpu_custom_call.1} parent=27 // pred_region
          %145 = dma.done %s137, 128
        $region32: #{tpu_custom_call.1} parent=27 // pred_fallthru
          _
        %p146 = pneg %p36
        %p147 = pneg %p33
        %s148 = sand.u32 %s49, 1
        %s149 = scalar_lea.sflag [#allocation4], %s148
        %s150 = sand.u32 %s49, 1
        %s151 = smul.addr %s150, 8
        %s152 = scalar_lea.vmem [#allocation3], %s151
        %p153 = pneg %p62
        %p154 = pneg %p59
        %p155 = pneg %p88
        %p156 = pneg %p85
        %s157 = sand.u32 %s75, 1
        %s158 = scalar_lea.sflag [#allocation5], %s157
        %s159 = sand.u32 %s75, 1
        %s160 = smul.addr %s159, 8
        %s161 = scalar_lea.vmem [#allocation6], %s160
        %v162 = vld [vmem:[%s140] sm:$0xff]
        %v163 = vmul.f32 %v162, %v162
        %v164 = vrot.slane %v163, 4
        %v165 = vadd.f32 %v163, %v164
        %v166 = vrot.slane %v165, 2
        %v167 = vadd.f32 %v165, %v166
        %v168 = vrot.slane %v167, 1
        %v169 = vadd.f32 %v167, %v168
        %170 = vadd.xlane.f32.xlu0 %v169
        %v171 = vpop.xlane.xlu0 %170
        %v172 = vmul.f32 %v171, 0.0009765625
        %v173 = vadd.f32 %v172, 1e-08
        %v174 = vrsqrt.pop %v173
        %v175 = vmul.f32 %v174, %v173
        %v176 = vmul.f32 %v175, %v174
        %v177 = vmul.f32 0.5, %v176
        %v178 = vsub.f32 1.5, %v177
        %v179 = vmul.f32 %v174, %v178
        %vm180 = vweird.f32 %v173
        %vm181 = vweird.f32 %v174
        %vm182 = vmor %vm180, %vm181
        %v183 = vsel %vm182, %v174, %v179
        %s184 = sld [smem:[#allocation2]]
        %v185 = vstv %s184
        %v186 = vmul.f32 %v183, %v185
        %v187 = vmul.f32 %v162, %v186
        %188 = vst [vmem:[%s161] sm:$0xff] %v187
        %s189 = sand.u32 %s75, 1
        %s190 = scalar_lea.sflag [#allocation5], %s189
        %s191 = sand.u32 %s75, 1
        %s192 = smul.addr %s191, 8
        %s193 = scalar_lea.vmem [#allocation6], %s192
        // Predicated region
        $region33: #{tpu_custom_call.1} parent=27 // pred_check
          %p194 = pneg %p85
        $region34: #{tpu_custom_call.1} parent=27 // pred_check_branch
          %196 = sbr.rel (%p194) target = $region36
        $region35: #{tpu_custom_call.1} parent=27 // pred_region
          %198 = vsyncadd %s190, 0
          %s199 = smul.addr %s20, 8
          %s200 = scalar_lea.hbm %s2, %s199
          %s202 = sshll.u32 %s193, 4
          %s203 = int_to_ptr.vmem [resolvable:$true] %s202
          %s204 = sshll.u32 %s200, 4
          %s205 = int_to_ptr.hbm [resolvable:$true] %s204
          %207 = dma.vmem_to_hbm [thread:$0]  %s203, 128, %s205, %s190
        $region36: #{tpu_custom_call.1} parent=27 // pred_fallthru
          _
      $region28: #{tpu_custom_call.1} parent=5 // pred_fallthru
        _
      %p208 = scmp.le.s32.totalorder 2, %s15
      // Predicated region
      $region37: #{tpu_custom_call.1} parent=5 // pred_check
        %p209 = pneg %p208
      $region38: #{tpu_custom_call.1} parent=5 // pred_check_branch
        %211 = sbr.rel (%p209) target = $region40
      $region39: #{tpu_custom_call.1} parent=5 // pred_region
        %s212 = ssub.s32 %s15, 2
        // Predicated region
        $region41: #{tpu_custom_call.1} parent=39 // pred_check
          %p213 = pneg %p91
        $region42: #{tpu_custom_call.1} parent=39 // pred_check_branch
          %215 = sbr.rel (%p213) target = $region44
        $region43: #{tpu_custom_call.1} parent=39 // pred_region
          %s216 = sand.u32 %s76, 1
          %s217 = scalar_lea.sflag [#allocation5], %s216
          %s218 = sand.u32 %s76, 1
          %s219 = smul.addr %s218, 8
          %s220 = scalar_lea.vmem [#allocation6], %s219
          %222 = dma.done %s217, 128
        $region44: #{tpu_custom_call.1} parent=39 // pred_fallthru
          _
      $region40: #{tpu_custom_call.1} parent=5 // pred_fallthru
        _
    $region6: #{tpu_custom_call.1} parent=1 // loop_footer
      %s19 = sadd.s32 1, %s15
    $region7: #{tpu_custom_call.1} parent=1 // loop_footer_branch
      %14 = sbr.rel target = $region3
    $region8: #{tpu_custom_call.1} parent=1 // loop_exit
      _
    %223 = vsyncpa [#allocation4], 1
    %s224 = scalar_lea.sflag [#allocation4], 1
    %225 = vsyncpa %s224, 1
    %226 = vsyncpa [#allocation5], 1
    %s227 = scalar_lea.sflag [#allocation5], 1
    %228 = vsyncpa %s227, 1

</llo_original>
